<compile_context>
chip_gen: v7x
topology: tpu7x:2x2x1
jax: 0.10.0
libtpu: 0.0.40
codegen_flags: <defaults>
</compile_context>

<pallas_src>
import jax
import jax.numpy as jnp
from jax.experimental import pallas as pl
from jax.experimental.pallas import tpu as pltpu


def _round_up(n, m):
    return ((n + m - 1) // m) * m


def mlp_kernel(x_ref, w1_ref, b1_ref, w2_ref, b2_ref, w3_ref, b3_ref, o_ref):
    x = x_ref[...]                                        # bf16 (TILE_B, F)

    # Linear(F -> n_hid) + ReLU   (BN1 folded into layer 2)
    h1 = jnp.dot(x, w1_ref[...], preferred_element_type=jnp.float32) + b1_ref[...]
    h1 = jnp.maximum(h1, 0.0)                             # f32 elementwise

    # Linear(n_hid -> n_hid//4) + ReLU   (BN2 folded into layer 3)
    h2 = jnp.dot(h1.astype(jnp.bfloat16), w2_ref[...],
                 preferred_element_type=jnp.float32) + b2_ref[...]
    h2 = jnp.maximum(h2, 0.0)                             # f32

    # Linear(n_hid//4 -> 1) as VPU mul + lane reduce (XLU) instead of an
    # N=1 MXU matmul (1/128 column utilization).
    o_ref[...] = jnp.sum(h2 * w3_ref[...], axis=-1, keepdims=True) + b3_ref[...]


def mlp_forward(x, folded_params, *, tile_b=512):
    """x: (B, F) f32.  folded_params: (w1, b1, w2f, b2f, w3row, b3f) f32."""
    w1, b1, w2, b2, w3row, b3 = folded_params
    B, F = x.shape
    n_hid = w1.shape[1]
    n_mid = w2.shape[1]

    # Tile the batch; (8,128) rule: tile_b multiple of 8, F kept as full dim.
    tile_b = min(tile_b, _round_up(B, 8))
    Bp = _round_up(B, tile_b)
    if Bp != B:
        x = jnp.pad(x, ((0, Bp - B), (0, 0)))

    # bf16 for MXU operands only; biases / final row / output stay f32.
    xb = x.astype(jnp.bfloat16)
    w1b = w1.astype(jnp.bfloat16)
    w2b = w2.astype(jnp.bfloat16)

    grid = (Bp // tile_b,)

    flops = 2 * Bp * (F * n_hid + n_hid * n_mid + n_mid)
    bytes_accessed = (Bp * F * 2 + w1b.size * 2 + w2b.size * 2
                      + (b1.size + b2.size + w3row.size + b3.size) * 4
                      + Bp * 4)

    # Weights/biases use a constant block index -> Pallas keeps them resident
    # in VMEM across grid steps (no re-DMA).
    const = lambda i: (0, 0)

    out = pl.pallas_call(
        mlp_kernel,
        out_shape=jax.ShapeDtypeStruct((Bp, 1), jnp.float32),
        grid=grid,
        in_specs=[
            pl.BlockSpec((tile_b, F), lambda i: (i, 0)),   # x tile (pipelined)
            pl.BlockSpec(w1b.shape, const),
            pl.BlockSpec(b1.shape, const),
            pl.BlockSpec(w2b.shape, const),
            pl.BlockSpec(b2.shape, const),
            pl.BlockSpec(w3row.shape, const),
            pl.BlockSpec(b3.shape, const),
        ],
        out_specs=pl.BlockSpec((tile_b, 1), lambda i: (i, 0)),
        compiler_params=pltpu.CompilerParams(
            dimension_semantics=("parallel",)),            # megacore on v7x
        cost_estimate=pl.CostEstimate(
            flops=flops, transcendentals=0, bytes_accessed=bytes_accessed),
    )(xb, w1b, b1, w2b, b2, w3row, b3)

    return out[:B]


def make_params(key, num_features, n_hid=128):
    """Raw params matching the PyTorch module's __init__ (eval mode BN stats)."""
    eps = 1e-5
    k1, k2, k3 = jax.random.split(key, 3)

    def kaiming_normal(k, out_f, in_f):
        # torch.nn.init.kaiming_normal_ default: fan_in, gain = sqrt(2)
        std = jnp.sqrt(2.0 / in_f)
        w = jax.random.normal(k, (out_f, in_f), dtype=jnp.float32) * std
        return w.T  # stored as (in, out) for x @ W

    n_mid = n_hid // 4
    w1 = kaiming_normal(k1, n_hid, num_features)
    b1 = jnp.zeros((1, n_hid), jnp.float32)
    w2 = kaiming_normal(k2, n_mid, n_hid)
    b2 = jnp.zeros((1, n_mid), jnp.float32)
    w3 = kaiming_normal(k3, 1, n_mid)
    b3 = jnp.zeros((1, 1), jnp.float32)

    # BatchNorm1d eval at init: y = x*scale + shift, scale = 1/sqrt(var+eps), shift = 0
    s1 = jnp.full((1, n_hid), 1.0 / jnp.sqrt(1.0 + eps), jnp.float32)
    t1 = jnp.zeros((1, n_hid), jnp.float32)
    s2 = jnp.full((1, n_mid), 1.0 / jnp.sqrt(1.0 + eps), jnp.float32)
    t2 = jnp.zeros((1, n_mid), jnp.float32)

    return (w1, b1, s1, t1, w2, b2, s2, t2, w3, b3)


def fold_bn_into_next(raw_params):
    """Fold eval-mode BN scale/shift into the following Linear's weights/bias."""
    (w1, b1, s1, t1, w2, b2, s2, t2, w3, b3) = raw_params
    w2f = w2 * s1.reshape(-1, 1)          # (n_hid, n_mid) rows scaled by s1
    b2f = t1 @ w2 + b2                    # (1, n_mid)
    w3row = (w3 * s2.reshape(-1, 1)).T    # (1, n_mid) row for VPU mul+reduce
    b3f = t2 @ w3 + b3                    # (1, 1)
    return (w1, b1, w2f, b2f, w3row, b3f)


if __name__ == "__main__":
    num_features = 32
    n_hid = 128
    batch = 64      # small, but tile_b=16 exercises a 4-step pipelined grid

    key = jax.random.PRNGKey(0)
    kx, kp = jax.random.split(key)
    x = jax.random.normal(kx, (batch, num_features), dtype=jnp.float32)

    raw = make_params(kp, num_features, n_hid)
    folded = fold_bn_into_next(raw)

    out = mlp_forward(x, folded, tile_b=16)
    jax.block_until_ready(out)

    # Pure-JAX f32 eval-mode reference of the original module (unfolded BN).
    (w1, b1, s1, t1, w2, b2, s2, t2, w3, b3) = raw
    h1 = jnp.maximum(x @ w1 + b1, 0.0) * s1 + t1
    h2 = jnp.maximum(h1 @ w2 + b2, 0.0) * s2 + t2
    ref = h2 @ w3 + b3

    assert out.shape == (batch, 1)
    # bf16 MXU operands -> compare against f32 reference with a bf16-level tolerance.
    assert jnp.allclose(out, ref, atol=3e-2, rtol=3e-2), float(jnp.max(jnp.abs(out - ref)))

    print("KERNEL_OK")
</pallas_src>

<mosaic_0001>
module attributes {stable_mosaic.version = 11 : i64} {
  func.func @mlp_kernel(%arg0: i32, %arg1: memref<16x32xbf16, #tpu.memory_space<vmem>>, %arg2: memref<32x128xbf16, #tpu.memory_space<vmem>>, %arg3: memref<1x128xf32, #tpu.memory_space<vmem>>, %arg4: memref<128x32xbf16, #tpu.memory_space<vmem>>, %arg5: memref<1x32xf32, #tpu.memory_space<vmem>>, %arg6: memref<1x32xf32, #tpu.memory_space<vmem>>, %arg7: memref<1x1xf32, #tpu.memory_space<vmem>>, %arg8: memref<16x1xf32, #tpu.memory_space<vmem>>) attributes {dimension_semantics = [#tpu.dimension_semantics<parallel>], iteration_bounds = array<i64: 4>, scalar_prefetch = 0 : i64, scratch_operands = 0 : i64, tpu.core_type = #tpu.core_type<tc>, window_params = [{transform_indices = @transform_0, window_bounds = array<i64: 16, 32>}, {pipeline_mode = #tpu.pipeline_mode<synchronous>, transform_indices = @transform_1, window_bounds = array<i64: 32, 128>}, {pipeline_mode = #tpu.pipeline_mode<synchronous>, transform_indices = @transform_2, window_bounds = array<i64: 1, 128>}, {pipeline_mode = #tpu.pipeline_mode<synchronous>, transform_indices = @transform_3, window_bounds = array<i64: 128, 32>}, {pipeline_mode = #tpu.pipeline_mode<synchronous>, transform_indices = @transform_4, window_bounds = array<i64: 1, 32>}, {pipeline_mode = #tpu.pipeline_mode<synchronous>, transform_indices = @transform_5, window_bounds = array<i64: 1, 32>}, {pipeline_mode = #tpu.pipeline_mode<synchronous>, transform_indices = @transform_6, window_bounds = array<i64: 1, 1>}, {transform_indices = @transform_7, window_bounds = array<i64: 16, 1>}]} {
    %c0 = arith.constant 0 : index
    %c0_0 = arith.constant 0 : index
    %0 = vector.load %arg1[%c0, %c0_0] : memref<16x32xbf16, #tpu.memory_space<vmem>>, vector<16x32xbf16>
    %c0_1 = arith.constant 0 : index
    %c0_2 = arith.constant 0 : index
    %1 = vector.load %arg2[%c0_1, %c0_2] : memref<32x128xbf16, #tpu.memory_space<vmem>>, vector<32x128xbf16>
    %cst = arith.constant dense<0.000000e+00> : vector<16x128xf32>
    %2 = tpu.matmul %0, %1, %cst {dimension_numbers = #tpu.dot_dimension_numbers<[1], [0], [0], [1], [0, 0, 1, 1], [], []>} : vector<16x32xbf16>, vector<32x128xbf16>, vector<16x128xf32> -> vector<16x128xf32>
    %c0_3 = arith.constant 0 : index
    %c0_4 = arith.constant 0 : index
    %3 = vector.load %arg3[%c0_3, %c0_4] : memref<1x128xf32, #tpu.memory_space<vmem>>, vector<1x128xf32>
    %4 = vector.broadcast %3 : vector<1x128xf32> to vector<16x128xf32>
    %5 = arith.addf %2, %4 : vector<16x128xf32>
    %cst_5 = arith.constant 0.000000e+00 : f32
    %6 = vector.broadcast %cst_5 : f32 to vector<16x128xf32>
    %7 = arith.maximumf %5, %6 : vector<16x128xf32>
    %8 = arith.truncf %7 : vector<16x128xf32> to vector<16x128xbf16>
    %c0_6 = arith.constant 0 : index
    %c0_7 = arith.constant 0 : index
    %9 = vector.load %arg4[%c0_6, %c0_7] : memref<128x32xbf16, #tpu.memory_space<vmem>>, vector<128x32xbf16>
    %cst_8 = arith.constant dense<0.000000e+00> : vector<16x32xf32>
    %10 = tpu.matmul %8, %9, %cst_8 {dimension_numbers = #tpu.dot_dimension_numbers<[1], [0], [0], [1], [0, 0, 1, 1], [], []>} : vector<16x128xbf16>, vector<128x32xbf16>, vector<16x32xf32> -> vector<16x32xf32>
    %c0_9 = arith.constant 0 : index
    %c0_10 = arith.constant 0 : index
    %11 = vector.load %arg5[%c0_9, %c0_10] : memref<1x32xf32, #tpu.memory_space<vmem>>, vector<1x32xf32>
    %12 = vector.broadcast %11 : vector<1x32xf32> to vector<16x32xf32>
    %13 = arith.addf %10, %12 : vector<16x32xf32>
    %cst_11 = arith.constant 0.000000e+00 : f32
    %14 = vector.broadcast %cst_11 : f32 to vector<16x32xf32>
    %15 = arith.maximumf %13, %14 : vector<16x32xf32>
    %c0_12 = arith.constant 0 : index
    %c0_13 = arith.constant 0 : index
    %16 = vector.load %arg6[%c0_12, %c0_13] : memref<1x32xf32, #tpu.memory_space<vmem>>, vector<1x32xf32>
    %17 = vector.broadcast %16 : vector<1x32xf32> to vector<16x32xf32>
    %18 = arith.mulf %15, %17 : vector<16x32xf32>
    %cst_14 = arith.constant dense<0.000000e+00> : vector<16xf32>
    %19 = vector.multi_reduction <add>, %18, %cst_14 [1] : vector<16x32xf32> to vector<16xf32>
    %20 = vector.shape_cast %19 : vector<16xf32> to vector<16x1xf32>
    %c0_15 = arith.constant 0 : index
    %c0_16 = arith.constant 0 : index
    %21 = vector.load %arg7[%c0_15, %c0_16] : memref<1x1xf32, #tpu.memory_space<vmem>>, vector<1x1xf32>
    %22 = vector.broadcast %21 : vector<1x1xf32> to vector<16x1xf32>
    %23 = arith.addf %20, %22 : vector<16x1xf32>
    %c0_17 = arith.constant 0 : index
    %c0_18 = arith.constant 0 : index
    %24 = vector.load %arg8[%c0_17, %c0_18] : memref<16x1xf32, #tpu.memory_space<vmem>>, vector<16x1xf32>
    tpu.vector_store %arg8[%c0_17, %c0_18], %23 {strides = array<i32>} : memref<16x1xf32, #tpu.memory_space<vmem>>, vector<16x1xf32>,
    return
  }
  func.func @transform_0(%arg0: i32) -> (i32, i32) {
    %c0_i32 = arith.constant 0 : i32
    %c0_i32_0 = arith.constant 0 : i32
    return %arg0, %c0_i32 : i32, i32
  }
  func.func @transform_1(%arg0: i32) -> (i32, i32) {
    %c0_i32 = arith.constant 0 : i32
    %c0_i32_0 = arith.constant 0 : i32
    %c0_i32_1 = arith.constant 0 : i32
    return %c0_i32, %c0_i32_0 : i32, i32
  }
  func.func @transform_2(%arg0: i32) -> (i32, i32) {
    %c0_i32 = arith.constant 0 : i32
    %c0_i32_0 = arith.constant 0 : i32
    %c0_i32_1 = arith.constant 0 : i32
    return %c0_i32, %c0_i32_0 : i32, i32
  }
  func.func @transform_3(%arg0: i32) -> (i32, i32) {
    %c0_i32 = arith.constant 0 : i32
    %c0_i32_0 = arith.constant 0 : i32
    %c0_i32_1 = arith.constant 0 : i32
    return %c0_i32, %c0_i32_0 : i32, i32
  }
  func.func @transform_4(%arg0: i32) -> (i32, i32) {
    %c0_i32 = arith.constant 0 : i32
    %c0_i32_0 = arith.constant 0 : i32
    %c0_i32_1 = arith.constant 0 : i32
    return %c0_i32, %c0_i32_0 : i32, i32
  }
  func.func @transform_5(%arg0: i32) -> (i32, i32) {
    %c0_i32 = arith.constant 0 : i32
    %c0_i32_0 = arith.constant 0 : i32
    %c0_i32_1 = arith.constant 0 : i32
    return %c0_i32, %c0_i32_0 : i32, i32
  }
  func.func @transform_6(%arg0: i32) -> (i32, i32) {
    %c0_i32 = arith.constant 0 : i32
    %c0_i32_0 = arith.constant 0 : i32
    %c0_i32_1 = arith.constant 0 : i32
    return %c0_i32, %c0_i32_0 : i32, i32
  }
  func.func @transform_7(%arg0: i32) -> (i32, i32) {
    %c0_i32 = arith.constant 0 : i32
    %c0_i32_0 = arith.constant 0 : i32
    return %arg0, %c0_i32 : i32, i32
  }
}

</mosaic_0001>

<llo_original>
// kernel: tpu_custom_call.1
$region0: #{tpu_custom_call.1}
  #allocation0 [shape = 'u32[]', space=smem, size = 0x4, offset = 0x4, fixed_abs, tag = 'smem constant byte address 0x4 - core index']
  #allocation1 [shape = 'u32[144,128]{1,0:T(1,128)}', space=vmem, size = 0x12000, scoped, tag = 'internal scratch']
  #allocation2 [shape = 'f32[1,1]{1,0:T(1,128)S(1)}', space=vmem, size = 0x200, scoped, tag = 'scoped memory for tpu_custom_call.1']
  %s0 = inlined_call_operand.vmem [shape: bf16[64,32], index: 0, kind: input, shape index: {}]
  %s1 = inlined_call_operand.vmem [shape: bf16[32,128], index: 1, kind: input, shape index: {}]
  %s2 = inlined_call_operand.vmem [shape: f32[1,128], index: 2, kind: input, shape index: {}]
  %s3 = inlined_call_operand.vmem [shape: bf16[128,32], index: 3, kind: input, shape index: {}]
  %s4 = inlined_call_operand.vmem [shape: f32[1,32], index: 4, kind: input, shape index: {}]
  %s5 = inlined_call_operand.vmem [shape: f32[1,32], index: 5, kind: input, shape index: {}]
  %s6 = inlined_call_operand.<no memory space> [shape: f32[1,1], index: 6, kind: input, shape index: {}]
  %s7 = inlined_call_operand.vmem [shape: f32[64,1], index: 7, kind: output, shape index: {}]
  %s8 = sld [smem:[#allocation0]]
  $region61: #{tpu_custom_call.1} parent=0
    _
  %s10 = ssub.s32 1, %s8
  %s11 = scalar_select 0, %s10, %s8
  %v12 = vstv %s6
  %13 = vst [vmem:[#allocation2] sm:$0x1] %v12
  loop: start=0, step=1, limit=6
  $region2: #{tpu_custom_call.1} parent=0 // loop_pre_header
    _
  $region3: #{tpu_custom_call.1} parent=0 // loop_header
    %s15 = sphi 0, %s19
    %p16 = scmp.ge.s32.totalorder %s15, 6
    %s25 = sphi 0, %s27
    %s28 = sphi 0, %s25
    %s29 = sphi 0, %s28
    %s45 = sphi 0, %s29
    %s49 = sphi 0, %s49
    %s51 = sphi 0, %s49
    %s52 = sphi 0, %s51
    %s66 = sphi 0, %s52
    %s70 = sphi 0, %s70
    %s72 = sphi 0, %s70
    %s73 = sphi 0, %s72
    %s87 = sphi 0, %s73
    %s91 = sphi 0, %s91
    %s93 = sphi 0, %s91
    %s94 = sphi 0, %s93
    %s108 = sphi 0, %s94
    %s112 = sphi 0, %s112
    %s114 = sphi 0, %s112
    %s115 = sphi 0, %s114
    %s129 = sphi 0, %s115
    %s133 = sphi 0, %s133
    %s135 = sphi 0, %s133
    %s136 = sphi 0, %s135
    %s150 = sphi 0, %s136
    %s154 = sphi 0, %s154
    %s156 = sphi 0, %s154
    %s157 = sphi 0, %s156
    %s171 = sphi 0, %s157
    %s177 = sphi 0, %s179
    %s180 = sphi 0, %s177
    %s181 = sphi 0, %s180
    %s197 = sphi 0, %s181
  $region4: #{tpu_custom_call.1} parent=0 // loop_header_branch
    %18 = sbr.rel (%p16) target = $region8
  $region5: #{tpu_custom_call.1} parent=0 // loop_body
    %s20 = ssub.s32 %s15, 1
    %s21 = ssub.s32 %s15, 2
    %s22 = sadd.s32 %s15, 1
    %s23 = ssub.s32 %s15, %s22
    %p24 = scmp.eq.s32.totalorder %s23, 0
    %s26 = sadd.s32 %s25, 1
    %s27 = scalar_select %p24, %s25, %s26
    %p30 = pneg %p24
    %p31 = scmp.eq.s32.totalorder %s15, 3
    %p32 = por %p30, %p31
    %p33 = scmp.ne.s32.totalorder %s25, %s28
    %p34 = scmp.eq.s32.totalorder %s15, 0
    %p35 = por %p33, %p34
    %p36 = scmp.ne.s32.totalorder %s25, %s28
    %p37 = scmp.eq.s32.totalorder %s20, 3
    %p38 = por %p36, %p37
    %p39 = scmp.ne.s32.totalorder %s28, %s29
    %p40 = scmp.eq.s32.totalorder %s20, 0
    %p41 = por %p39, %p40
    %p42 = scmp.ne.s32.totalorder %s28, %s29
    %p43 = scmp.eq.s32.totalorder %s21, 3
    %p44 = por %p42, %p43
    %p46 = scmp.ne.s32.totalorder %s29, %s45
    %p47 = scmp.eq.s32.totalorder %s21, 0
    %p48 = por %p46, %p47
    %s50 = sadd.s32 %s49, 1
    %p53 = scmp.eq.s32.totalorder %s15, 3
    %p54 = scmp.ne.s32.totalorder %s49, %s51
    %p55 = scmp.eq.s32.totalorder %s15, 0
    %p56 = por %p54, %p55
    %p57 = scmp.ne.s32.totalorder %s49, %s51
    %p58 = scmp.eq.s32.totalorder %s20, 3
    %p59 = por %p57, %p58
    %p60 = scmp.ne.s32.totalorder %s51, %s52
    %p61 = scmp.eq.s32.totalorder %s20, 0
    %p62 = por %p60, %p61
    %p63 = scmp.ne.s32.totalorder %s51, %s52
    %p64 = scmp.eq.s32.totalorder %s21, 3
    %p65 = por %p63, %p64
    %p67 = scmp.ne.s32.totalorder %s52, %s66
    %p68 = scmp.eq.s32.totalorder %s21, 0
    %p69 = por %p67, %p68
    %s71 = sadd.s32 %s70, 1
    %p74 = scmp.eq.s32.totalorder %s15, 3
    %p75 = scmp.ne.s32.totalorder %s70, %s72
    %p76 = scmp.eq.s32.totalorder %s15, 0
    %p77 = por %p75, %p76
    %p78 = scmp.ne.s32.totalorder %s70, %s72
    %p79 = scmp.eq.s32.totalorder %s20, 3
    %p80 = por %p78, %p79
    %p81 = scmp.ne.s32.totalorder %s72, %s73
    %p82 = scmp.eq.s32.totalorder %s20, 0
    %p83 = por %p81, %p82
    %p84 = scmp.ne.s32.totalorder %s72, %s73
    %p85 = scmp.eq.s32.totalorder %s21, 3
    %p86 = por %p84, %p85
    %p88 = scmp.ne.s32.totalorder %s73, %s87
    %p89 = scmp.eq.s32.totalorder %s21, 0
    %p90 = por %p88, %p89
    %s92 = sadd.s32 %s91, 1
    %p95 = scmp.eq.s32.totalorder %s15, 3
    %p96 = scmp.ne.s32.totalorder %s91, %s93
    %p97 = scmp.eq.s32.totalorder %s15, 0
    %p98 = por %p96, %p97
    %p99 = scmp.ne.s32.totalorder %s91, %s93
    %p100 = scmp.eq.s32.totalorder %s20, 3
    %p101 = por %p99, %p100
    %p102 = scmp.ne.s32.totalorder %s93, %s94
    %p103 = scmp.eq.s32.totalorder %s20, 0
    %p104 = por %p102, %p103
    %p105 = scmp.ne.s32.totalorder %s93, %s94
    %p106 = scmp.eq.s32.totalorder %s21, 3
    %p107 = por %p105, %p106
    %p109 = scmp.ne.s32.totalorder %s94, %s108
    %p110 = scmp.eq.s32.totalorder %s21, 0
    %p111 = por %p109, %p110
    %s113 = sadd.s32 %s112, 1
    %p116 = scmp.eq.s32.totalorder %s15, 3
    %p117 = scmp.ne.s32.totalorder %s112, %s114
    %p118 = scmp.eq.s32.totalorder %s15, 0
    %p119 = por %p117, %p118
    %p120 = scmp.ne.s32.totalorder %s112, %s114
    %p121 = scmp.eq.s32.totalorder %s20, 3
    %p122 = por %p120, %p121
    %p123 = scmp.ne.s32.totalorder %s114, %s115
    %p124 = scmp.eq.s32.totalorder %s20, 0
    %p125 = por %p123, %p124
    %p126 = scmp.ne.s32.totalorder %s114, %s115
    %p127 = scmp.eq.s32.totalorder %s21, 3
    %p128 = por %p126, %p127
    %p130 = scmp.ne.s32.totalorder %s115, %s129
    %p131 = scmp.eq.s32.totalorder %s21, 0
    %p132 = por %p130, %p131
    %s134 = sadd.s32 %s133, 1
    %p137 = scmp.eq.s32.totalorder %s15, 3
    %p138 = scmp.ne.s32.totalorder %s133, %s135
    %p139 = scmp.eq.s32.totalorder %s15, 0
    %p140 = por %p138, %p139
    %p141 = scmp.ne.s32.totalorder %s133, %s135
    %p142 = scmp.eq.s32.totalorder %s20, 3
    %p143 = por %p141, %p142
    %p144 = scmp.ne.s32.totalorder %s135, %s136
    %p145 = scmp.eq.s32.totalorder %s20, 0
    %p146 = por %p144, %p145
    %p147 = scmp.ne.s32.totalorder %s135, %s136
    %p148 = scmp.eq.s32.totalorder %s21, 3
    %p149 = por %p147, %p148
    %p151 = scmp.ne.s32.totalorder %s136, %s150
    %p152 = scmp.eq.s32.totalorder %s21, 0
    %p153 = por %p151, %p152
    %s155 = sadd.s32 %s154, 1
    %p158 = scmp.eq.s32.totalorder %s15, 3
    %p159 = scmp.ne.s32.totalorder %s154, %s156
    %p160 = scmp.eq.s32.totalorder %s15, 0
    %p161 = por %p159, %p160
    %p162 = scmp.ne.s32.totalorder %s154, %s156
    %p163 = scmp.eq.s32.totalorder %s20, 3
    %p164 = por %p162, %p163
    %p165 = scmp.ne.s32.totalorder %s156, %s157
    %p166 = scmp.eq.s32.totalorder %s20, 0
    %p167 = por %p165, %p166
    %p168 = scmp.ne.s32.totalorder %s156, %s157
    %p169 = scmp.eq.s32.totalorder %s21, 3
    %p170 = por %p168, %p169
    %p172 = scmp.ne.s32.totalorder %s157, %s171
    %p173 = scmp.eq.s32.totalorder %s21, 0
    %p174 = por %p172, %p173
    %s175 = ssub.s32 %s15, %s22
    %p176 = scmp.eq.s32.totalorder %s175, 0
    %s178 = sadd.s32 %s177, 1
    %s179 = scalar_select %p176, %s177, %s178
    %p182 = pneg %p176
    %p183 = scmp.eq.s32.totalorder %s15, 3
    %p184 = por %p182, %p183
    %p185 = scmp.ne.s32.totalorder %s177, %s180
    %p186 = scmp.eq.s32.totalorder %s15, 0
    %p187 = por %p185, %p186
    %p188 = scmp.ne.s32.totalorder %s177, %s180
    %p189 = scmp.eq.s32.totalorder %s20, 3
    %p190 = por %p188, %p189
    %p191 = scmp.ne.s32.totalorder %s180, %s181
    %p192 = scmp.eq.s32.totalorder %s20, 0
    %p193 = por %p191, %p192
    %p194 = scmp.ne.s32.totalorder %s180, %s181
    %p195 = scmp.eq.s32.totalorder %s21, 3
    %p196 = por %p194, %p195
    %p198 = scmp.ne.s32.totalorder %s181, %s197
    %p199 = scmp.eq.s32.totalorder %s21, 0
    %p200 = por %p198, %p199
    %p201 = scmp.le.s32.totalorder 1, %s15
    %p202 = scmp.lt.s32.totalorder %s15, 5
    %p203 = pnand %p201, %p202
    %p204 = pneg %p203
    // Predicated region
    $region9: #{tpu_custom_call.1} parent=5 // pred_check
      _
    $region10: #{tpu_custom_call.1} parent=5 // pred_check_branch
      %206 = sbr.rel (%p203) target = $region12
    $region11: #{tpu_custom_call.1} parent=5 // pred_region
      %s207 = ssub.s32 %s15, 1
      // Predicated region
      $region13: #{tpu_custom_call.1} parent=11 // pred_check
        %p208 = pneg %p62
      $region14: #{tpu_custom_call.1} parent=11 // pred_check_branch
        %210 = sbr.rel (%p208) target = $region16
      $region15: #{tpu_custom_call.1} parent=11 // pred_region
        _
      $region16: #{tpu_custom_call.1} parent=11 // pred_fallthru
        _
      // Predicated region
      $region17: #{tpu_custom_call.1} parent=11 // pred_check
        %p211 = pneg %p83
      $region18: #{tpu_custom_call.1} parent=11 // pred_check_branch
        %213 = sbr.rel (%p211) target = $region20
      $region19: #{tpu_custom_call.1} parent=11 // pred_region
        _
      $region20: #{tpu_custom_call.1} parent=11 // pred_fallthru
        _
      // Predicated region
      $region21: #{tpu_custom_call.1} parent=11 // pred_check
        %p214 = pneg %p104
      $region22: #{tpu_custom_call.1} parent=11 // pred_check_branch
        %216 = sbr.rel (%p214) target = $region24
      $region23: #{tpu_custom_call.1} parent=11 // pred_region
        _
      $region24: #{tpu_custom_call.1} parent=11 // pred_fallthru
        _
      // Predicated region
      $region25: #{tpu_custom_call.1} parent=11 // pred_check
        %p217 = pneg %p125
      $region26: #{tpu_custom_call.1} parent=11 // pred_check_branch
        %219 = sbr.rel (%p217) target = $region28
      $region27: #{tpu_custom_call.1} parent=11 // pred_region
        _
      $region28: #{tpu_custom_call.1} parent=11 // pred_fallthru
        _
      // Predicated region
      $region29: #{tpu_custom_call.1} parent=11 // pred_check
        %p220 = pneg %p146
      $region30: #{tpu_custom_call.1} parent=11 // pred_check_branch
        %222 = sbr.rel (%p220) target = $region32
      $region31: #{tpu_custom_call.1} parent=11 // pred_region
        _
      $region32: #{tpu_custom_call.1} parent=11 // pred_fallthru
        _
      // Predicated region
      $region33: #{tpu_custom_call.1} parent=11 // pred_check
        %p223 = pneg %p167
      $region34: #{tpu_custom_call.1} parent=11 // pred_check_branch
        %225 = sbr.rel (%p223) target = $region36
      $region35: #{tpu_custom_call.1} parent=11 // pred_region
        _
      $region36: #{tpu_custom_call.1} parent=11 // pred_fallthru
        _
    $region12: #{tpu_custom_call.1} parent=5 // pred_fallthru
      _
    %p226 = scmp.lt.s32.totalorder %s15, 4
    // Predicated region
    $region37: #{tpu_custom_call.1} parent=5 // pred_check
      %p227 = pneg %p226
    $region38: #{tpu_custom_call.1} parent=5 // pred_check_branch
      %229 = sbr.rel (%p227) target = $region40
    $region39: #{tpu_custom_call.1} parent=5 // pred_region
      // Predicated region
      $region41: #{tpu_custom_call.1} parent=39 // pred_check
        %p230 = pneg %p35
      $region42: #{tpu_custom_call.1} parent=39 // pred_check_branch
        %232 = sbr.rel (%p230) target = $region44
      $region43: #{tpu_custom_call.1} parent=39 // pred_region
        %s233 = smul.u32 2, %s15
        %p234 = scmp.lt.s32.totalorder %s233, 7
        %s235 = scalar_select %p234, %s233, 7
        %s236 = smul.addr %s235, 4
        %s237 = scalar_lea.vmem %s0, %s236
        %s238 = smul.u32 2, %s15
      $region44: #{tpu_custom_call.1} parent=39 // pred_fallthru
        _
    $region40: #{tpu_custom_call.1} parent=5 // pred_fallthru
      _
    %p239 = scmp.le.s32.totalorder 1, %s15
    %p240 = scmp.lt.s32.totalorder %s15, 5
    %p241 = pnand %p239, %p240
    %p242 = pneg %p241
    // Predicated region
    $region45: #{tpu_custom_call.1} parent=5 // pred_check
      _
    $region46: #{tpu_custom_call.1} parent=5 // pred_check_branch
      %244 = sbr.rel (%p241) target = $region48
    $region47: #{tpu_custom_call.1} parent=5 // pred_region
      %s245 = ssub.s32 %s15, 1
      %s246 = smul.u32 2, %s20
      %p247 = scmp.lt.s32.totalorder %s246, 7
      %s248 = scalar_select %p247, %s246, 7
      %s249 = smul.addr %s248, 4
      %s250 = scalar_lea.vmem %s0, %s249
      %p251 = pneg %p41
      %p252 = pneg %p38
      %p253 = pneg %p62
      %p254 = pneg %p59
      %p255 = pneg %p83
      %p256 = pneg %p80
      %p257 = pneg %p104
      %p258 = pneg %p101
      %p259 = pneg %p125
      %p260 = pneg %p122
      %p261 = pneg %p146
      %p262 = pneg %p143
      %p263 = pneg %p167
      %p264 = pneg %p164
      %p265 = pneg %p193
      %p266 = pneg %p190
      %s267 = smul.u32 2, %s20
      %p268 = scmp.lt.s32.totalorder %s267, 7
      %s269 = scalar_select %p268, %s267, 7
      %s270 = smul.addr %s269, 8
      %s271 = scalar_lea.vmem %s7, %s270
      %s272 = smul.u32 2, %s20
      %p273 = scmp.lt.s32.totalorder %s272, 7
      %s274 = scalar_select %p273, %s272, 7
      %s275 = smul.addr %s274, 4
      %s276 = scalar_lea.vmem %s0, %s275
      %s277 = smul.u32 2, %s20
      %s278 = smul.u32 2, %s20
      %p279 = scmp.lt.s32.totalorder %s278, 7
      %s280 = scalar_select %p279, %s278, 7
      %s281 = smul.addr %s280, 8
      %s282 = scalar_lea.vmem %s7, %s281
      %s283 = smul.u32 2, %s20
      %v285 = vld [vmem:[%s276] sm:$0xf]
      %v286 = vld [vmem:[%s276 + $0x4] sm:$0xf]
      %v287 = vld [vmem:[%s1] sm:$0xf]
      %v288 = vld [vmem:[%s1 + $0x4] sm:$0xf]
      %v289 = vld [vmem:[%s1 + $0x8] sm:$0xf]
      %v290 = vld [vmem:[%s1 + $0xc] sm:$0xf]
      %v291 = vld [vmem:[%s2] sm:$0x1]
      %v293 = vlaneseq
      %v294 = vshrl.u32 %v293, 7
      %v295 = vsub.s32 0, %v294
      %v296 = vrot.slane %v291, %v295
      %v300 = vunpack.c.l.b16 %v285
      %v301 = vunpack.c.l.b16 %v286
      %v302 = vpack.c.b16 %v301, %v300
      %v307 = vunpack.c.l.b16 %v287
      %v308 = vunpack.c.l.b16 %v288
      %v309 = vunpack.c.l.b16 %v289
      %v310 = vunpack.c.l.b16 %v290
      %v311 = vpack.c.b16 %v308, %v307
      %v312 = vpack.c.b16 %v310, %v309
      %vm315 = vcmask 261120
      %v317 = vsel %vm315, %v302, 0
      %319 = vmatprep.subr.bf16.mxu0 0
      %320 = vmatpush1.bf16.msra.mxu0 %v311
      %321 = vmatprep.subr.bf16.mxu0 0
      %322 = vmatpush1.bf16.msra.mxu0 %v312
      %323 = vmatprep.subr.bf16.mxu0 0
      %324 = vmatpush1.bf16.msra.mxu0 0
      %325 = vmatprep.subr.bf16.mxu0 0
      %326 = vmatpush1.bf16.msra.mxu0 0
      %327 = vmatprep.subr.bf16.mxu0 0
      %328 = vmatpush1.bf16.msra.mxu0 0
      %329 = vmatprep.subr.bf16.mxu0 0
      %330 = vmatpush1.bf16.msra.mxu0 0
      %331 = vmatprep.subr.bf16.mxu0 0
      %332 = vmatpush1.bf16.msra.mxu0 0
      %333 = vmatprep.subr.bf16.mxu0 0
      %334 = vmatpush1.bf16.msra.mxu0 0
      %335 = vmatprep.subr.bf16.mxu0 0
      %336 = vmatpush1.bf16.msra.mxu0 0
      %337 = vmatprep.subr.bf16.mxu0 0
      %338 = vmatpush1.bf16.msra.mxu0 0
      %339 = vmatprep.subr.bf16.mxu0 0
      %340 = vmatpush1.bf16.msra.mxu0 0
      %341 = vmatprep.subr.bf16.mxu0 0
      %342 = vmatpush1.bf16.msra.mxu0 0
      %343 = vmatprep.subr.bf16.mxu0 0
      %344 = vmatpush1.bf16.msra.mxu0 0
      %345 = vmatprep.subr.bf16.mxu0 0
      %346 = vmatpush1.bf16.msra.mxu0 0
      %347 = vmatprep.subr.bf16.mxu0 0
      %348 = vmatpush1.bf16.msra.mxu0 0
      %349 = vmatprep.subr.bf16.mxu0 0
      %350 = vmatpush1.bf16.msra.mxu0 0
      %351 = vmatprep.mubr.bf16.mxu0 0
      %352 = vmatmul.mubr.bf16.gmra.mrb[0].mxu0 %v317
      %v353 = vpop.f32.mrb[0].mxu0
      %v354 = vadd.f32 %v296, %v353
      %v355 = vpop.f32.mrb[0].mxu0
      %v356 = vpop.f32.mrb[0].mxu0
      %v357 = vadd.f32 %v296, %v356
      %v358 = vpop.f32.mrb[0].mxu0
      %359 = vdwg.mxu0
      %v360 = vmax.f32 %v354, 0.0
      %v361 = vmax.f32 %v357, 0.0
      %v362 = vpack.c.bf16 %v361, %v360
      %v363 = vld [vmem:[%s3] sm:$0xf]
      %v364 = vld [vmem:[%s3 + $0x4] sm:$0xf]
      %v365 = vld [vmem:[%s3 + $0x8] sm:$0xf]
      %v366 = vld [vmem:[%s3 + $0xc] sm:$0xf]
      %v367 = vld [vmem:[%s3 + $0x10] sm:$0xf]
      %v368 = vld [vmem:[%s3 + $0x14] sm:$0xf]
      %v369 = vld [vmem:[%s3 + $0x18] sm:$0xf]
      %v370 = vld [vmem:[%s3 + $0x1c] sm:$0xf]
      %v371 = vld [vmem:[%s3 + $0x20] sm:$0xf]
      %v372 = vld [vmem:[%s3 + $0x24] sm:$0xf]
      %v373 = vld [vmem:[%s3 + $0x28] sm:$0xf]
      %v374 = vld [vmem:[%s3 + $0x2c] sm:$0xf]
      %v375 = vld [vmem:[%s3 + $0x30] sm:$0xf]
      %v376 = vld [vmem:[%s3 + $0x34] sm:$0xf]
      %v377 = vld [vmem:[%s3 + $0x38] sm:$0xf]
      %v378 = vld [vmem:[%s3 + $0x3c] sm:$0xf]
      %v379 = vld [vmem:[%s4] sm:$0x1]
      %v381 = vlaneseq
      %v382 = vshrl.u32 %v381, 7
      %v383 = vsub.s32 0, %v382
      %v384 = vrot.slane %v379, %v383
      %v402 = vunpack.c.l.b16 %v363
      %v403 = vunpack.c.l.b16 %v364
      %v404 = vunpack.c.l.b16 %v365
      %v405 = vunpack.c.l.b16 %v366
      %v406 = vunpack.c.l.b16 %v367
      %v407 = vunpack.c.l.b16 %v368
      %v408 = vunpack.c.l.b16 %v369
      %v409 = vunpack.c.l.b16 %v370
      %v410 = vunpack.c.l.b16 %v371
      %v411 = vunpack.c.l.b16 %v372
      %v412 = vunpack.c.l.b16 %v373
      %v413 = vunpack.c.l.b16 %v374
      %v414 = vunpack.c.l.b16 %v375
      %v415 = vunpack.c.l.b16 %v376
      %v416 = vunpack.c.l.b16 %v377
      %v417 = vunpack.c.l.b16 %v378
      %v418 = vpack.c.b16 %v403, %v402
      %v419 = vpack.c.b16 %v405, %v404
      %v420 = vpack.c.b16 %v407, %v406
      %v421 = vpack.c.b16 %v409, %v408
      %v422 = vpack.c.b16 %v411, %v410
      %v423 = vpack.c.b16 %v413, %v412
      %v424 = vpack.c.b16 %v415, %v414
      %v425 = vpack.c.b16 %v417, %v416
      %434 = vmatprep.subr.bf16.mxu0 0
      %435 = vmatpush1.bf16.msra.mxu0 %v418
      %436 = vmatprep.subr.bf16.mxu0 0
      %437 = vmatpush1.bf16.msra.mxu0 %v419
      %438 = vmatprep.subr.bf16.mxu0 0
      %439 = vmatpush1.bf16.msra.mxu0 %v420
      %440 = vmatprep.subr.bf16.mxu0 0
      %441 = vmatpush1.bf16.msra.mxu0 %v421
      %442 = vmatprep.subr.bf16.mxu0 0
      %443 = vmatpush1.bf16.msra.mxu0 %v422
      %444 = vmatprep.subr.bf16.mxu0 0
      %445 = vmatpush1.bf16.msra.mxu0 %v423
      %446 = vmatprep.subr.bf16.mxu0 0
      %447 = vmatpush1.bf16.msra.mxu0 %v424
      %448 = vmatprep.subr.bf16.mxu0 0
      %449 = vmatpush1.bf16.msra.mxu0 %v425
      %450 = vmatprep.subr.bf16.mxu0 0
      %451 = vmatpush1.bf16.msra.mxu0 0
      %452 = vmatprep.subr.bf16.mxu0 0
      %453 = vmatpush1.bf16.msra.mxu0 0
      %454 = vmatprep.subr.bf16.mxu0 0
      %455 = vmatpush1.bf16.msra.mxu0 0
      %456 = vmatprep.subr.bf16.mxu0 0
      %457 = vmatpush1.bf16.msra.mxu0 0
      %458 = vmatprep.subr.bf16.mxu0 0
      %459 = vmatpush1.bf16.msra.mxu0 0
      %460 = vmatprep.subr.bf16.mxu0 0
      %461 = vmatpush1.bf16.msra.mxu0 0
      %462 = vmatprep.subr.bf16.mxu0 0
      %463 = vmatpush1.bf16.msra.mxu0 0
      %464 = vmatprep.subr.bf16.mxu0 0
      %465 = vmatpush1.bf16.msra.mxu0 0
      %466 = vmatprep.mubr.bf16.mxu0 0
      %467 = vmatmul.mubr.bf16.gmra.mrb[0].mxu0 %v362
      %v468 = vpop.f32.mrb[0].mxu0
      %v469 = vadd.f32 %v384, %v468
      %v470 = vpop.f32.mrb[0].mxu0
      %v471 = vpop.f32.mrb[0].mxu0
      %v472 = vadd.f32 %v384, %v471
      %v473 = vpop.f32.mrb[0].mxu0
      %474 = vdwg.mxu0
      %v475 = vmax.f32 %v469, 0.0
      %v476 = vmax.f32 %v472, 0.0
      %v477 = vld [vmem:[%s5] sm:$0x1]
      %v479 = vlaneseq
      %v480 = vshrl.u32 %v479, 7
      %v481 = vsub.s32 0, %v480
      %v482 = vrot.slane %v477, %v481
      %v484 = vmul.f32 %v475, %v482
      %v485 = vmul.f32 %v476, %v482
      %v486 = vsel %vm315, %v484, 0.0
      %487 = vadd.xlane.f32.xlu0 %v486
      %v488 = vpop.xlane.xlu0 %487
      %v489 = vsel %vm315, %v485, 0.0
      %490 = vadd.xlane.f32.xlu0 %v489
      %v491 = vpop.xlane.xlu0 %490
      %v492 = vld [vmem:[#allocation2] sm:$0x1]
      %v494 = vlaneseq
      %v495 = vshrl.u32 %v494, 7
      %v496 = vsub.s32 0, %v495
      %v497 = vrot.slane %v492, %v496
      %v499 = vadd.f32 %v488, %v497
      %v500 = vadd.f32 %v491, %v497
      %vm501 = vcmask 7168
      %502 = vst.msk [vmem:[%s282] sm:$0xff] %vm501, %v499
      %503 = vst.msk [vmem:[%s282 + $0x8] sm:$0xff] %vm501, %v500
      %s504 = smul.u32 2, %s20
      %p505 = scmp.lt.s32.totalorder %s504, 7
      %s506 = scalar_select %p505, %s504, 7
      %s507 = smul.addr %s506, 8
      %s508 = scalar_lea.vmem %s7, %s507
      // Predicated region
      $region49: #{tpu_custom_call.1} parent=47 // pred_check
        %p509 = pneg %p190
      $region50: #{tpu_custom_call.1} parent=47 // pred_check_branch
        %511 = sbr.rel (%p509) target = $region52
      $region51: #{tpu_custom_call.1} parent=47 // pred_region
        %s512 = smul.u32 2, %s20
      $region52: #{tpu_custom_call.1} parent=47 // pred_fallthru
        _
    $region48: #{tpu_custom_call.1} parent=5 // pred_fallthru
      _
    %p513 = scmp.le.s32.totalorder 2, %s15
    // Predicated region
    $region53: #{tpu_custom_call.1} parent=5 // pred_check
      %p514 = pneg %p513
    $region54: #{tpu_custom_call.1} parent=5 // pred_check_branch
      %516 = sbr.rel (%p514) target = $region56
    $region55: #{tpu_custom_call.1} parent=5 // pred_region
      %s517 = ssub.s32 %s15, 2
      // Predicated region
      $region57: #{tpu_custom_call.1} parent=55 // pred_check
        %p518 = pneg %p196
      $region58: #{tpu_custom_call.1} parent=55 // pred_check_branch
        %520 = sbr.rel (%p518) target = $region60
      $region59: #{tpu_custom_call.1} parent=55 // pred_region
        %s521 = smul.u32 2, %s21
        %p522 = scmp.lt.s32.totalorder %s521, 7
        %s523 = scalar_select %p522, %s521, 7
        %s524 = smul.addr %s523, 8
        %s525 = scalar_lea.vmem %s7, %s524
      $region60: #{tpu_custom_call.1} parent=55 // pred_fallthru
        _
    $region56: #{tpu_custom_call.1} parent=5 // pred_fallthru
      _
  $region6: #{tpu_custom_call.1} parent=0 // loop_footer
    %s19 = sadd.s32 1, %s15
  $region7: #{tpu_custom_call.1} parent=0 // loop_footer_branch
    %14 = sbr.rel target = $region3
  $region8: #{tpu_custom_call.1} parent=0 // loop_exit
    _

</llo_original>
